<compile_context>
chip_gen: v7x
topology: tpu7x:2x2x1
jax: 0.10.0
libtpu: 0.0.40
codegen_flags: <defaults>
</compile_context>

<pallas_src>
import jax
import jax.numpy as jnp
from jax.experimental import pallas as pl
from jax.experimental.pallas import tpu as pltpu


# ---------------------------------------------------------------------------
# Kernel: fused 3-layer MLP on one batch tile.
# ---------------------------------------------------------------------------
def mlp_kernel(x_ref, w1_ref, b1_ref, w2_ref, b2_ref, w3_ref, b3_ref, o_ref):
    x = x_ref[...]                                                    # (TM, 9) f32

    # Layer 1: Linear(9 -> 64) + ReLU (MXU, f32 accumulate; bias/ReLU on VPU).
    h1 = jnp.dot(x, w1_ref[...], preferred_element_type=jnp.float32)
    h1 = jnp.maximum(h1 + b1_ref[...], 0.0)                           # (TM, 64)

    # Layer 2: Linear(64 -> 64) + ReLU.
    h2 = jnp.dot(h1, w2_ref[...], preferred_element_type=jnp.float32)
    h2 = jnp.maximum(h2 + b2_ref[...], 0.0)                           # (TM, 64)

    # Layer 3: Linear(64 -> 2), no activation.  Narrow (TM, 2) store.
    out = jnp.dot(h2, w3_ref[...], preferred_element_type=jnp.float32)
    o_ref[...] = out + b3_ref[...]                                    # (TM, 2)


# ---------------------------------------------------------------------------
# Wrapper
# ---------------------------------------------------------------------------
def _round_up(n, m):
    return ((n + m - 1) // m) * m


def mlp_forward(x, w1, b1, w2, b2, w3, b3, *, tm=4096):
    """x: (B, 9) float32 -> (B, 2) float32."""
    B, K = x.shape
    N = w3.shape[1]                               # 2

    # TM: multiple of 8 (f32 sublane), no larger than the (rounded-up) batch.
    tm = max(8, min(tm, _round_up(B, 8)))
    # Guarantee >= 2 grid steps when the batch allows it, so both v7x
    # TensorCores get work (harmless on single-TC v5e/v6e).
    if B > 16 and _round_up(B, tm) // tm < 2:
        tm = _round_up(pl.cdiv(B, 2), 8)
    B_pad = _round_up(B, tm)

    # Only a cheap batch-dim pad (no feature pad, no dtype cast).
    x_p = jnp.pad(x, ((0, B_pad - B), (0, 0))) if B_pad != B else x

    const = lambda a: pl.BlockSpec(a.shape, lambda i: (0, 0))

    out = pl.pallas_call(
        mlp_kernel,
        out_shape=jax.ShapeDtypeStruct((B_pad, N), jnp.float32),
        grid=(B_pad // tm,),
        in_specs=[
            pl.BlockSpec((tm, K), lambda i: (i, 0)),   # x tile, pipelined over batch
            const(w1), const(b1),                      # weights/biases: block 0 always
            const(w2), const(b2),                      #   -> DMA'd once, VMEM-resident
            const(w3), const(b3),
        ],
        out_specs=pl.BlockSpec((tm, N), lambda i: (i, 0)),
        compiler_params=pltpu.CompilerParams(
            dimension_semantics=("parallel",),         # megacore split on v7x
        ),
    )(x_p, w1, b1, w2, b2, w3, b3)

    return out[:B] if B_pad != B else out


# ---------------------------------------------------------------------------
# Parameters (PyTorch nn.Linear-equivalent init, stored (in, out) / (1, out))
# ---------------------------------------------------------------------------
def init_params(key):
    k1, k2, k3, k4, k5, k6 = jax.random.split(key, 6)

    def uinit(k, fan_in, shape):
        bound = 1.0 / jnp.sqrt(fan_in)
        return jax.random.uniform(k, shape, jnp.float32, -bound, bound)

    w1 = uinit(k1, 9,  (9, 64));  b1 = uinit(k2, 9,  (1, 64))
    w2 = uinit(k3, 64, (64, 64)); b2 = uinit(k4, 64, (1, 64))
    w3 = uinit(k5, 64, (64, 2));  b3 = uinit(k6, 64, (1, 2))
    return w1, b1, w2, b2, w3, b3


# ---------------------------------------------------------------------------
# Pure-JAX reference (PyTorch-equivalent math)
# ---------------------------------------------------------------------------
def mlp_reference(x, w1, b1, w2, b2, w3, b3):
    hp = jax.lax.Precision.HIGHEST
    h1 = jnp.maximum(jnp.dot(x, w1, precision=hp) + b1, 0.0)
    h2 = jnp.maximum(jnp.dot(h1, w2, precision=hp) + b2, 0.0)
    return jnp.dot(h2, w3, precision=hp) + b3


# ---------------------------------------------------------------------------
# Demo / self-test
# ---------------------------------------------------------------------------
if __name__ == "__main__":
    key = jax.random.PRNGKey(0)
    kx, kp = jax.random.split(key)

    # Small batch, not a multiple of 8: exercises the batch-pad path and the
    # 2-step (megacore-friendly) grid split.
    B = 257
    x = jax.random.normal(kx, (B, 9), dtype=jnp.float32)
    params = init_params(kp)

    out = jax.block_until_ready(mlp_forward(x, *params))
    assert out.shape == (B, 2), out.shape

    ref = mlp_reference(x, *params)
    assert jnp.allclose(out, ref, atol=2e-2, rtol=2e-2), (
        "max abs diff = %g" % float(jnp.max(jnp.abs(out - ref)))
    )

    print("KERNEL_OK")
</pallas_src>

<mosaic_0001>
module attributes {stable_mosaic.version = 11 : i64} {
  func.func @mlp_kernel(%arg0: i32, %arg1: memref<136x9xf32, #tpu.memory_space<vmem>>, %arg2: memref<9x64xf32, #tpu.memory_space<vmem>>, %arg3: memref<1x64xf32, #tpu.memory_space<vmem>>, %arg4: memref<64x64xf32, #tpu.memory_space<vmem>>, %arg5: memref<1x64xf32, #tpu.memory_space<vmem>>, %arg6: memref<64x2xf32, #tpu.memory_space<vmem>>, %arg7: memref<1x2xf32, #tpu.memory_space<vmem>>, %arg8: memref<136x2xf32, #tpu.memory_space<vmem>>) attributes {dimension_semantics = [#tpu.dimension_semantics<parallel>], iteration_bounds = array<i64: 2>, scalar_prefetch = 0 : i64, scratch_operands = 0 : i64, tpu.core_type = #tpu.core_type<tc>, window_params = [{transform_indices = @transform_0, window_bounds = array<i64: 136, 9>}, {pipeline_mode = #tpu.pipeline_mode<synchronous>, transform_indices = @transform_1, window_bounds = array<i64: 9, 64>}, {pipeline_mode = #tpu.pipeline_mode<synchronous>, transform_indices = @transform_2, window_bounds = array<i64: 1, 64>}, {pipeline_mode = #tpu.pipeline_mode<synchronous>, transform_indices = @transform_3, window_bounds = array<i64: 64, 64>}, {pipeline_mode = #tpu.pipeline_mode<synchronous>, transform_indices = @transform_4, window_bounds = array<i64: 1, 64>}, {pipeline_mode = #tpu.pipeline_mode<synchronous>, transform_indices = @transform_5, window_bounds = array<i64: 64, 2>}, {pipeline_mode = #tpu.pipeline_mode<synchronous>, transform_indices = @transform_6, window_bounds = array<i64: 1, 2>}, {transform_indices = @transform_7, window_bounds = array<i64: 136, 2>}]} {
    %c0 = arith.constant 0 : index
    %c0_0 = arith.constant 0 : index
    %0 = vector.load %arg1[%c0, %c0_0] : memref<136x9xf32, #tpu.memory_space<vmem>>, vector<136x9xf32>
    %c0_1 = arith.constant 0 : index
    %c0_2 = arith.constant 0 : index
    %1 = vector.load %arg2[%c0_1, %c0_2] : memref<9x64xf32, #tpu.memory_space<vmem>>, vector<9x64xf32>
    %cst = arith.constant dense<0.000000e+00> : vector<136x64xf32>
    %2 = tpu.matmul %0, %1, %cst {dimension_numbers = #tpu.dot_dimension_numbers<[1], [0], [0], [1], [0, 0, 1, 1], [], []>} : vector<136x9xf32>, vector<9x64xf32>, vector<136x64xf32> -> vector<136x64xf32>
    %c0_3 = arith.constant 0 : index
    %c0_4 = arith.constant 0 : index
    %3 = vector.load %arg3[%c0_3, %c0_4] : memref<1x64xf32, #tpu.memory_space<vmem>>, vector<1x64xf32>
    %4 = vector.broadcast %3 : vector<1x64xf32> to vector<136x64xf32>
    %5 = arith.addf %2, %4 : vector<136x64xf32>
    %cst_5 = arith.constant 0.000000e+00 : f32
    %6 = vector.broadcast %cst_5 : f32 to vector<136x64xf32>
    %7 = arith.maximumf %5, %6 : vector<136x64xf32>
    %c0_6 = arith.constant 0 : index
    %c0_7 = arith.constant 0 : index
    %8 = vector.load %arg4[%c0_6, %c0_7] : memref<64x64xf32, #tpu.memory_space<vmem>>, vector<64x64xf32>
    %cst_8 = arith.constant dense<0.000000e+00> : vector<136x64xf32>
    %9 = tpu.matmul %7, %8, %cst_8 {dimension_numbers = #tpu.dot_dimension_numbers<[1], [0], [0], [1], [0, 0, 1, 1], [], []>} : vector<136x64xf32>, vector<64x64xf32>, vector<136x64xf32> -> vector<136x64xf32>
    %c0_9 = arith.constant 0 : index
    %c0_10 = arith.constant 0 : index
    %10 = vector.load %arg5[%c0_9, %c0_10] : memref<1x64xf32, #tpu.memory_space<vmem>>, vector<1x64xf32>
    %11 = vector.broadcast %10 : vector<1x64xf32> to vector<136x64xf32>
    %12 = arith.addf %9, %11 : vector<136x64xf32>
    %cst_11 = arith.constant 0.000000e+00 : f32
    %13 = vector.broadcast %cst_11 : f32 to vector<136x64xf32>
    %14 = arith.maximumf %12, %13 : vector<136x64xf32>
    %c0_12 = arith.constant 0 : index
    %c0_13 = arith.constant 0 : index
    %15 = vector.load %arg6[%c0_12, %c0_13] : memref<64x2xf32, #tpu.memory_space<vmem>>, vector<64x2xf32>
    %cst_14 = arith.constant dense<0.000000e+00> : vector<136x2xf32>
    %16 = tpu.matmul %14, %15, %cst_14 {dimension_numbers = #tpu.dot_dimension_numbers<[1], [0], [0], [1], [0, 0, 1, 1], [], []>} : vector<136x64xf32>, vector<64x2xf32>, vector<136x2xf32> -> vector<136x2xf32>
    %c0_15 = arith.constant 0 : index
    %c0_16 = arith.constant 0 : index
    %17 = vector.load %arg7[%c0_15, %c0_16] : memref<1x2xf32, #tpu.memory_space<vmem>>, vector<1x2xf32>
    %18 = vector.broadcast %17 : vector<1x2xf32> to vector<136x2xf32>
    %19 = arith.addf %16, %18 : vector<136x2xf32>
    %c0_17 = arith.constant 0 : index
    %c0_18 = arith.constant 0 : index
    %20 = vector.load %arg8[%c0_17, %c0_18] : memref<136x2xf32, #tpu.memory_space<vmem>>, vector<136x2xf32>
    tpu.vector_store %arg8[%c0_17, %c0_18], %19 {strides = array<i32>} : memref<136x2xf32, #tpu.memory_space<vmem>>, vector<136x2xf32>,
    return
  }
  func.func @transform_0(%arg0: i32) -> (i32, i32) {
    %c0_i32 = arith.constant 0 : i32
    %c0_i32_0 = arith.constant 0 : i32
    return %arg0, %c0_i32 : i32, i32
  }
  func.func @transform_1(%arg0: i32) -> (i32, i32) {
    %c0_i32 = arith.constant 0 : i32
    %c0_i32_0 = arith.constant 0 : i32
    %c0_i32_1 = arith.constant 0 : i32
    return %c0_i32, %c0_i32_0 : i32, i32
  }
  func.func @transform_2(%arg0: i32) -> (i32, i32) {
    %c0_i32 = arith.constant 0 : i32
    %c0_i32_0 = arith.constant 0 : i32
    %c0_i32_1 = arith.constant 0 : i32
    return %c0_i32, %c0_i32_0 : i32, i32
  }
  func.func @transform_3(%arg0: i32) -> (i32, i32) {
    %c0_i32 = arith.constant 0 : i32
    %c0_i32_0 = arith.constant 0 : i32
    %c0_i32_1 = arith.constant 0 : i32
    return %c0_i32, %c0_i32_0 : i32, i32
  }
  func.func @transform_4(%arg0: i32) -> (i32, i32) {
    %c0_i32 = arith.constant 0 : i32
    %c0_i32_0 = arith.constant 0 : i32
    %c0_i32_1 = arith.constant 0 : i32
    return %c0_i32, %c0_i32_0 : i32, i32
  }
  func.func @transform_5(%arg0: i32) -> (i32, i32) {
    %c0_i32 = arith.constant 0 : i32
    %c0_i32_0 = arith.constant 0 : i32
    %c0_i32_1 = arith.constant 0 : i32
    return %c0_i32, %c0_i32_0 : i32, i32
  }
  func.func @transform_6(%arg0: i32) -> (i32, i32) {
    %c0_i32 = arith.constant 0 : i32
    %c0_i32_0 = arith.constant 0 : i32
    %c0_i32_1 = arith.constant 0 : i32
    return %c0_i32, %c0_i32_0 : i32, i32
  }
  func.func @transform_7(%arg0: i32) -> (i32, i32) {
    %c0_i32 = arith.constant 0 : i32
    %c0_i32_0 = arith.constant 0 : i32
    return %arg0, %c0_i32 : i32, i32
  }
}

</mosaic_0001>

<llo_original>
// kernel: tpu_custom_call.1
$region0: #{tpu_custom_call.1}
  #allocation0 [shape = 'u32[]', space=smem, size = 0x4, offset = 0x4, fixed_abs, tag = 'smem constant byte address 0x4 - core index']
  #allocation1 [shape = 'u32[144,128]{1,0:T(1,128)}', space=vmem, size = 0x12000, scoped, tag = 'internal scratch']
  %s0 = inlined_call_operand.vmem [shape: f32[272,9], index: 0, kind: input, shape index: {}]
  %s1 = inlined_call_operand.vmem [shape: f32[9,64], index: 1, kind: input, shape index: {}]
  %s2 = inlined_call_operand.vmem [shape: f32[1,64], index: 2, kind: input, shape index: {}]
  %s3 = inlined_call_operand.vmem [shape: f32[64,64], index: 3, kind: input, shape index: {}]
  %s4 = inlined_call_operand.vmem [shape: f32[1,64], index: 4, kind: input, shape index: {}]
  %s5 = inlined_call_operand.vmem [shape: f32[64,2], index: 5, kind: input, shape index: {}]
  %s6 = inlined_call_operand.vmem [shape: f32[1,2], index: 6, kind: input, shape index: {}]
  %s7 = inlined_call_operand.vmem [shape: f32[272,2], index: 7, kind: output, shape index: {}]
  %s8 = sld [smem:[#allocation0]]
  $region61: #{tpu_custom_call.1} parent=0
    _
  %s10 = ssub.s32 1, %s8
  %s11 = scalar_select 0, %s10, %s8
  loop: start=0, step=1, limit=4
  $region2: #{tpu_custom_call.1} parent=0 // loop_pre_header
    _
  $region3: #{tpu_custom_call.1} parent=0 // loop_header
    %s13 = sphi 0, %s17
    %p14 = scmp.ge.s32.totalorder %s13, 4
    %s23 = sphi 0, %s25
    %s26 = sphi 0, %s23
    %s27 = sphi 0, %s26
    %s43 = sphi 0, %s27
    %s47 = sphi 0, %s47
    %s49 = sphi 0, %s47
    %s50 = sphi 0, %s49
    %s64 = sphi 0, %s50
    %s68 = sphi 0, %s68
    %s70 = sphi 0, %s68
    %s71 = sphi 0, %s70
    %s85 = sphi 0, %s71
    %s89 = sphi 0, %s89
    %s91 = sphi 0, %s89
    %s92 = sphi 0, %s91
    %s106 = sphi 0, %s92
    %s110 = sphi 0, %s110
    %s112 = sphi 0, %s110
    %s113 = sphi 0, %s112
    %s127 = sphi 0, %s113
    %s131 = sphi 0, %s131
    %s133 = sphi 0, %s131
    %s134 = sphi 0, %s133
    %s148 = sphi 0, %s134
    %s152 = sphi 0, %s152
    %s154 = sphi 0, %s152
    %s155 = sphi 0, %s154
    %s169 = sphi 0, %s155
    %s175 = sphi 0, %s177
    %s178 = sphi 0, %s175
    %s179 = sphi 0, %s178
    %s195 = sphi 0, %s179
  $region4: #{tpu_custom_call.1} parent=0 // loop_header_branch
    %16 = sbr.rel (%p14) target = $region8
  $region5: #{tpu_custom_call.1} parent=0 // loop_body
    %s18 = ssub.s32 %s13, 1
    %s19 = ssub.s32 %s13, 2
    %s20 = sadd.s32 %s13, 1
    %s21 = ssub.s32 %s13, %s20
    %p22 = scmp.eq.s32.totalorder %s21, 0
    %s24 = sadd.s32 %s23, 1
    %s25 = scalar_select %p22, %s23, %s24
    %p28 = pneg %p22
    %p29 = scmp.eq.s32.totalorder %s13, 1
    %p30 = por %p28, %p29
    %p31 = scmp.ne.s32.totalorder %s23, %s26
    %p32 = scmp.eq.s32.totalorder %s13, 0
    %p33 = por %p31, %p32
    %p34 = scmp.ne.s32.totalorder %s23, %s26
    %p35 = scmp.eq.s32.totalorder %s18, 1
    %p36 = por %p34, %p35
    %p37 = scmp.ne.s32.totalorder %s26, %s27
    %p38 = scmp.eq.s32.totalorder %s18, 0
    %p39 = por %p37, %p38
    %p40 = scmp.ne.s32.totalorder %s26, %s27
    %p41 = scmp.eq.s32.totalorder %s19, 1
    %p42 = por %p40, %p41
    %p44 = scmp.ne.s32.totalorder %s27, %s43
    %p45 = scmp.eq.s32.totalorder %s19, 0
    %p46 = por %p44, %p45
    %s48 = sadd.s32 %s47, 1
    %p51 = scmp.eq.s32.totalorder %s13, 1
    %p52 = scmp.ne.s32.totalorder %s47, %s49
    %p53 = scmp.eq.s32.totalorder %s13, 0
    %p54 = por %p52, %p53
    %p55 = scmp.ne.s32.totalorder %s47, %s49
    %p56 = scmp.eq.s32.totalorder %s18, 1
    %p57 = por %p55, %p56
    %p58 = scmp.ne.s32.totalorder %s49, %s50
    %p59 = scmp.eq.s32.totalorder %s18, 0
    %p60 = por %p58, %p59
    %p61 = scmp.ne.s32.totalorder %s49, %s50
    %p62 = scmp.eq.s32.totalorder %s19, 1
    %p63 = por %p61, %p62
    %p65 = scmp.ne.s32.totalorder %s50, %s64
    %p66 = scmp.eq.s32.totalorder %s19, 0
    %p67 = por %p65, %p66
    %s69 = sadd.s32 %s68, 1
    %p72 = scmp.eq.s32.totalorder %s13, 1
    %p73 = scmp.ne.s32.totalorder %s68, %s70
    %p74 = scmp.eq.s32.totalorder %s13, 0
    %p75 = por %p73, %p74
    %p76 = scmp.ne.s32.totalorder %s68, %s70
    %p77 = scmp.eq.s32.totalorder %s18, 1
    %p78 = por %p76, %p77
    %p79 = scmp.ne.s32.totalorder %s70, %s71
    %p80 = scmp.eq.s32.totalorder %s18, 0
    %p81 = por %p79, %p80
    %p82 = scmp.ne.s32.totalorder %s70, %s71
    %p83 = scmp.eq.s32.totalorder %s19, 1
    %p84 = por %p82, %p83
    %p86 = scmp.ne.s32.totalorder %s71, %s85
    %p87 = scmp.eq.s32.totalorder %s19, 0
    %p88 = por %p86, %p87
    %s90 = sadd.s32 %s89, 1
    %p93 = scmp.eq.s32.totalorder %s13, 1
    %p94 = scmp.ne.s32.totalorder %s89, %s91
    %p95 = scmp.eq.s32.totalorder %s13, 0
    %p96 = por %p94, %p95
    %p97 = scmp.ne.s32.totalorder %s89, %s91
    %p98 = scmp.eq.s32.totalorder %s18, 1
    %p99 = por %p97, %p98
    %p100 = scmp.ne.s32.totalorder %s91, %s92
    %p101 = scmp.eq.s32.totalorder %s18, 0
    %p102 = por %p100, %p101
    %p103 = scmp.ne.s32.totalorder %s91, %s92
    %p104 = scmp.eq.s32.totalorder %s19, 1
    %p105 = por %p103, %p104
    %p107 = scmp.ne.s32.totalorder %s92, %s106
    %p108 = scmp.eq.s32.totalorder %s19, 0
    %p109 = por %p107, %p108
    %s111 = sadd.s32 %s110, 1
    %p114 = scmp.eq.s32.totalorder %s13, 1
    %p115 = scmp.ne.s32.totalorder %s110, %s112
    %p116 = scmp.eq.s32.totalorder %s13, 0
    %p117 = por %p115, %p116
    %p118 = scmp.ne.s32.totalorder %s110, %s112
    %p119 = scmp.eq.s32.totalorder %s18, 1
    %p120 = por %p118, %p119
    %p121 = scmp.ne.s32.totalorder %s112, %s113
    %p122 = scmp.eq.s32.totalorder %s18, 0
    %p123 = por %p121, %p122
    %p124 = scmp.ne.s32.totalorder %s112, %s113
    %p125 = scmp.eq.s32.totalorder %s19, 1
    %p126 = por %p124, %p125
    %p128 = scmp.ne.s32.totalorder %s113, %s127
    %p129 = scmp.eq.s32.totalorder %s19, 0
    %p130 = por %p128, %p129
    %s132 = sadd.s32 %s131, 1
    %p135 = scmp.eq.s32.totalorder %s13, 1
    %p136 = scmp.ne.s32.totalorder %s131, %s133
    %p137 = scmp.eq.s32.totalorder %s13, 0
    %p138 = por %p136, %p137
    %p139 = scmp.ne.s32.totalorder %s131, %s133
    %p140 = scmp.eq.s32.totalorder %s18, 1
    %p141 = por %p139, %p140
    %p142 = scmp.ne.s32.totalorder %s133, %s134
    %p143 = scmp.eq.s32.totalorder %s18, 0
    %p144 = por %p142, %p143
    %p145 = scmp.ne.s32.totalorder %s133, %s134
    %p146 = scmp.eq.s32.totalorder %s19, 1
    %p147 = por %p145, %p146
    %p149 = scmp.ne.s32.totalorder %s134, %s148
    %p150 = scmp.eq.s32.totalorder %s19, 0
    %p151 = por %p149, %p150
    %s153 = sadd.s32 %s152, 1
    %p156 = scmp.eq.s32.totalorder %s13, 1
    %p157 = scmp.ne.s32.totalorder %s152, %s154
    %p158 = scmp.eq.s32.totalorder %s13, 0
    %p159 = por %p157, %p158
    %p160 = scmp.ne.s32.totalorder %s152, %s154
    %p161 = scmp.eq.s32.totalorder %s18, 1
    %p162 = por %p160, %p161
    %p163 = scmp.ne.s32.totalorder %s154, %s155
    %p164 = scmp.eq.s32.totalorder %s18, 0
    %p165 = por %p163, %p164
    %p166 = scmp.ne.s32.totalorder %s154, %s155
    %p167 = scmp.eq.s32.totalorder %s19, 1
    %p168 = por %p166, %p167
    %p170 = scmp.ne.s32.totalorder %s155, %s169
    %p171 = scmp.eq.s32.totalorder %s19, 0
    %p172 = por %p170, %p171
    %s173 = ssub.s32 %s13, %s20
    %p174 = scmp.eq.s32.totalorder %s173, 0
    %s176 = sadd.s32 %s175, 1
    %s177 = scalar_select %p174, %s175, %s176
    %p180 = pneg %p174
    %p181 = scmp.eq.s32.totalorder %s13, 1
    %p182 = por %p180, %p181
    %p183 = scmp.ne.s32.totalorder %s175, %s178
    %p184 = scmp.eq.s32.totalorder %s13, 0
    %p185 = por %p183, %p184
    %p186 = scmp.ne.s32.totalorder %s175, %s178
    %p187 = scmp.eq.s32.totalorder %s18, 1
    %p188 = por %p186, %p187
    %p189 = scmp.ne.s32.totalorder %s178, %s179
    %p190 = scmp.eq.s32.totalorder %s18, 0
    %p191 = por %p189, %p190
    %p192 = scmp.ne.s32.totalorder %s178, %s179
    %p193 = scmp.eq.s32.totalorder %s19, 1
    %p194 = por %p192, %p193
    %p196 = scmp.ne.s32.totalorder %s179, %s195
    %p197 = scmp.eq.s32.totalorder %s19, 0
    %p198 = por %p196, %p197
    %p199 = scmp.le.s32.totalorder 1, %s13
    %p200 = scmp.lt.s32.totalorder %s13, 3
    %p201 = pnand %p199, %p200
    %p202 = pneg %p201
    // Predicated region
    $region9: #{tpu_custom_call.1} parent=5 // pred_check
      _
    $region10: #{tpu_custom_call.1} parent=5 // pred_check_branch
      %204 = sbr.rel (%p201) target = $region12
    $region11: #{tpu_custom_call.1} parent=5 // pred_region
      %s205 = ssub.s32 %s13, 1
      // Predicated region
      $region13: #{tpu_custom_call.1} parent=11 // pred_check
        %p206 = pneg %p60
      $region14: #{tpu_custom_call.1} parent=11 // pred_check_branch
        %208 = sbr.rel (%p206) target = $region16
      $region15: #{tpu_custom_call.1} parent=11 // pred_region
        _
      $region16: #{tpu_custom_call.1} parent=11 // pred_fallthru
        _
      // Predicated region
      $region17: #{tpu_custom_call.1} parent=11 // pred_check
        %p209 = pneg %p81
      $region18: #{tpu_custom_call.1} parent=11 // pred_check_branch
        %211 = sbr.rel (%p209) target = $region20
      $region19: #{tpu_custom_call.1} parent=11 // pred_region
        _
      $region20: #{tpu_custom_call.1} parent=11 // pred_fallthru
        _
      // Predicated region
      $region21: #{tpu_custom_call.1} parent=11 // pred_check
        %p212 = pneg %p102
      $region22: #{tpu_custom_call.1} parent=11 // pred_check_branch
        %214 = sbr.rel (%p212) target = $region24
      $region23: #{tpu_custom_call.1} parent=11 // pred_region
        _
      $region24: #{tpu_custom_call.1} parent=11 // pred_fallthru
        _
      // Predicated region
      $region25: #{tpu_custom_call.1} parent=11 // pred_check
        %p215 = pneg %p123
      $region26: #{tpu_custom_call.1} parent=11 // pred_check_branch
        %217 = sbr.rel (%p215) target = $region28
      $region27: #{tpu_custom_call.1} parent=11 // pred_region
        _
      $region28: #{tpu_custom_call.1} parent=11 // pred_fallthru
        _
      // Predicated region
      $region29: #{tpu_custom_call.1} parent=11 // pred_check
        %p218 = pneg %p144
      $region30: #{tpu_custom_call.1} parent=11 // pred_check_branch
        %220 = sbr.rel (%p218) target = $region32
      $region31: #{tpu_custom_call.1} parent=11 // pred_region
        _
      $region32: #{tpu_custom_call.1} parent=11 // pred_fallthru
        _
      // Predicated region
      $region33: #{tpu_custom_call.1} parent=11 // pred_check
        %p221 = pneg %p165
      $region34: #{tpu_custom_call.1} parent=11 // pred_check_branch
        %223 = sbr.rel (%p221) target = $region36
      $region35: #{tpu_custom_call.1} parent=11 // pred_region
        _
      $region36: #{tpu_custom_call.1} parent=11 // pred_fallthru
        _
    $region12: #{tpu_custom_call.1} parent=5 // pred_fallthru
      _
    %p224 = scmp.lt.s32.totalorder %s13, 2
    // Predicated region
    $region37: #{tpu_custom_call.1} parent=5 // pred_check
      %p225 = pneg %p224
    $region38: #{tpu_custom_call.1} parent=5 // pred_check_branch
      %227 = sbr.rel (%p225) target = $region40
    $region39: #{tpu_custom_call.1} parent=5 // pred_region
      // Predicated region
      $region41: #{tpu_custom_call.1} parent=39 // pred_check
        %p228 = pneg %p33
      $region42: #{tpu_custom_call.1} parent=39 // pred_check_branch
        %230 = sbr.rel (%p228) target = $region44
      $region43: #{tpu_custom_call.1} parent=39 // pred_region
        %s231 = smul.u32 17, %s13
        %p232 = scmp.lt.s32.totalorder %s231, 33
        %s233 = scalar_select %p232, %s231, 33
        %s234 = smul.addr %s233, 8
        %s235 = scalar_lea.vmem %s0, %s234
        %s236 = smul.u32 17, %s13
      $region44: #{tpu_custom_call.1} parent=39 // pred_fallthru
        _
    $region40: #{tpu_custom_call.1} parent=5 // pred_fallthru
      _
    %p237 = scmp.le.s32.totalorder 1, %s13
    %p238 = scmp.lt.s32.totalorder %s13, 3
    %p239 = pnand %p237, %p238
    %p240 = pneg %p239
    // Predicated region
    $region45: #{tpu_custom_call.1} parent=5 // pred_check
      _
    $region46: #{tpu_custom_call.1} parent=5 // pred_check_branch
      %242 = sbr.rel (%p239) target = $region48
    $region47: #{tpu_custom_call.1} parent=5 // pred_region
      %s243 = ssub.s32 %s13, 1
      %s244 = smul.u32 17, %s18
      %p245 = scmp.lt.s32.totalorder %s244, 33
      %s246 = scalar_select %p245, %s244, 33
      %s247 = smul.addr %s246, 8
      %s248 = scalar_lea.vmem %s0, %s247
      %p249 = pneg %p39
      %p250 = pneg %p36
      %p251 = pneg %p60
      %p252 = pneg %p57
      %p253 = pneg %p81
      %p254 = pneg %p78
      %p255 = pneg %p102
      %p256 = pneg %p99
      %p257 = pneg %p123
      %p258 = pneg %p120
      %p259 = pneg %p144
      %p260 = pneg %p141
      %p261 = pneg %p165
      %p262 = pneg %p162
      %p263 = pneg %p191
      %p264 = pneg %p188
      %s265 = smul.u32 17, %s18
      %p266 = scmp.lt.s32.totalorder %s265, 33
      %s267 = scalar_select %p266, %s265, 33
      %s268 = smul.addr %s267, 8
      %s269 = scalar_lea.vmem %s7, %s268
      %s270 = smul.u32 17, %s18
      %p271 = scmp.lt.s32.totalorder %s270, 33
      %s272 = scalar_select %p271, %s270, 33
      %s273 = smul.addr %s272, 8
      %s274 = scalar_lea.vmem %s0, %s273
      %s275 = smul.u32 17, %s18
      %s276 = smul.u32 17, %s18
      %p277 = scmp.lt.s32.totalorder %s276, 33
      %s278 = scalar_select %p277, %s276, 33
      %s279 = smul.addr %s278, 8
      %s280 = scalar_lea.vmem %s7, %s279
      %s281 = smul.u32 17, %s18
      %v282 = vld [vmem:[%s274] sm:$0xff]
      %v283 = vld [vmem:[%s274 + $0x8] sm:$0xff]
      %v284 = vld [vmem:[%s274 + $0x10] sm:$0xff]
      %v285 = vld [vmem:[%s274 + $0x18] sm:$0xff]
      %v286 = vld [vmem:[%s274 + $0x20] sm:$0xff]
      %v287 = vld [vmem:[%s274 + $0x28] sm:$0xff]
      %v288 = vld [vmem:[%s274 + $0x30] sm:$0xff]
      %v289 = vld [vmem:[%s274 + $0x38] sm:$0xff]
      %v290 = vld [vmem:[%s274 + $0x40] sm:$0xff]
      %v291 = vld [vmem:[%s274 + $0x48] sm:$0xff]
      %v292 = vld [vmem:[%s274 + $0x50] sm:$0xff]
      %v293 = vld [vmem:[%s274 + $0x58] sm:$0xff]
      %v294 = vld [vmem:[%s274 + $0x60] sm:$0xff]
      %v295 = vld [vmem:[%s274 + $0x68] sm:$0xff]
      %v296 = vld [vmem:[%s274 + $0x70] sm:$0xff]
      %v297 = vld [vmem:[%s274 + $0x78] sm:$0xff]
      %v298 = vld [vmem:[%s274 + $0x80] sm:$0xff]
      %v299 = vld [vmem:[%s1] sm:$0xff]
      %v300 = vld [vmem:[%s1 + $0x8] sm:$0x1]
      %v301 = vld [vmem:[%s2] sm:$0x1]
      %v303 = vlaneseq
      %v304 = vshrl.u32 %v303, 7
      %v305 = vsub.s32 0, %v304
      %v306 = vrot.slane %v301, %v305
      %vm308 = vcmask 72704
      %v310 = vsel %vm308, %v282, 0
      %v313 = vsel %vm308, %v283, 0
      %v316 = vsel %vm308, %v284, 0
      %v319 = vsel %vm308, %v285, 0
      %v322 = vsel %vm308, %v286, 0
      %v325 = vsel %vm308, %v287, 0
      %v328 = vsel %vm308, %v288, 0
      %v331 = vsel %vm308, %v289, 0
      %v334 = vsel %vm308, %v290, 0
      %v337 = vsel %vm308, %v291, 0
      %v340 = vsel %vm308, %v292, 0
      %v343 = vsel %vm308, %v293, 0
      %v346 = vsel %vm308, %v294, 0
      %v349 = vsel %vm308, %v295, 0
      %v352 = vsel %vm308, %v296, 0
      %v355 = vsel %vm308, %v297, 0
      %v358 = vsel %vm308, %v298, 0
      %vm360 = vcmask 1040384
      %v362 = vsel %vm360, %v300, 0
      %364 = vmatprep.subr.mxu0 0.0
      %365 = vmatpush1.msra.mxu0 %v299
      %366 = vmatprep.subr.mxu0 0.0
      %367 = vmatpush1.msra.mxu0 %v362
      %368 = vmatprep.subr.mxu0 0.0
      %369 = vmatpush1.msra.mxu0 0.0
      %370 = vmatprep.subr.mxu0 0.0
      %371 = vmatpush1.msra.mxu0 0.0
      %372 = vmatprep.subr.mxu0 0.0
      %373 = vmatpush1.msra.mxu0 0.0
      %374 = vmatprep.subr.mxu0 0.0
      %375 = vmatpush1.msra.mxu0 0.0
      %376 = vmatprep.subr.mxu0 0.0
      %377 = vmatpush1.msra.mxu0 0.0
      %378 = vmatprep.subr.mxu0 0.0
      %379 = vmatpush1.msra.mxu0 0.0
      %380 = vmatprep.subr.mxu0 0.0
      %381 = vmatpush1.msra.mxu0 0.0
      %382 = vmatprep.subr.mxu0 0.0
      %383 = vmatpush1.msra.mxu0 0.0
      %384 = vmatprep.subr.mxu0 0.0
      %385 = vmatpush1.msra.mxu0 0.0
      %386 = vmatprep.subr.mxu0 0.0
      %387 = vmatpush1.msra.mxu0 0.0
      %388 = vmatprep.subr.mxu0 0.0
      %389 = vmatpush1.msra.mxu0 0.0
      %390 = vmatprep.subr.mxu0 0.0
      %391 = vmatpush1.msra.mxu0 0.0
      %392 = vmatprep.subr.mxu0 0.0
      %393 = vmatpush1.msra.mxu0 0.0
      %394 = vmatprep.subr.mxu0 0.0
      %395 = vmatpush1.msra.mxu0 0.0
      %396 = vmatprep.subr.mxu0 0.0
      %397 = vmatpush1.msra.mxu0 0.0
      %398 = vmatprep.subr.mxu0 0.0
      %399 = vmatpush1.msra.mxu0 0.0
      %400 = vmatprep.subr.mxu0 0.0
      %401 = vmatpush1.msra.mxu0 0.0
      %402 = vmatprep.subr.mxu0 0.0
      %403 = vmatpush1.msra.mxu0 0.0
      %404 = vmatprep.subr.mxu0 0.0
      %405 = vmatpush1.msra.mxu0 0.0
      %406 = vmatprep.subr.mxu0 0.0
      %407 = vmatpush1.msra.mxu0 0.0
      %408 = vmatprep.subr.mxu0 0.0
      %409 = vmatpush1.msra.mxu0 0.0
      %410 = vmatprep.subr.mxu0 0.0
      %411 = vmatpush1.msra.mxu0 0.0
      %412 = vmatprep.subr.mxu0 0.0
      %413 = vmatpush1.msra.mxu0 0.0
      %414 = vmatprep.subr.mxu0 0.0
      %415 = vmatpush1.msra.mxu0 0.0
      %416 = vmatprep.subr.mxu0 0.0
      %417 = vmatpush1.msra.mxu0 0.0
      %418 = vmatprep.subr.mxu0 0.0
      %419 = vmatpush1.msra.mxu0 0.0
      %420 = vmatprep.subr.mxu0 0.0
      %421 = vmatpush1.msra.mxu0 0.0
      %422 = vmatprep.subr.mxu0 0.0
      %423 = vmatpush1.msra.mxu0 0.0
      %424 = vmatprep.subr.mxu0 0.0
      %425 = vmatpush1.msra.mxu0 0.0
      %426 = vmatprep.subr.mxu0 0.0
      %427 = vmatpush1.msra.mxu0 0.0
      %428 = vmatprep.mubr.f32.mxu0 0.0
      %429 = vmatmul.mubr.f32.gmra.mrb[0].mxu0 %v310
      %v430 = vpop.f32.mrb[0].mxu0
      %v431 = vadd.f32 %v306, %v430
      %v432 = vpop.f32.mrb[0].mxu0
      %433 = vmatprep.mubr.f32.mxu0 0.0
      %434 = vmatmul.mubr.f32.gmra.mrb[0].mxu0 %v313
      %v435 = vpop.f32.mrb[0].mxu0
      %v436 = vadd.f32 %v306, %v435
      %v437 = vpop.f32.mrb[0].mxu0
      %438 = vmatprep.mubr.f32.mxu0 0.0
      %439 = vmatmul.mubr.f32.gmra.mrb[0].mxu0 %v316
      %v440 = vpop.f32.mrb[0].mxu0
      %v441 = vadd.f32 %v306, %v440
      %v442 = vpop.f32.mrb[0].mxu0
      %443 = vmatprep.mubr.f32.mxu0 0.0
      %444 = vmatmul.mubr.f32.gmra.mrb[0].mxu0 %v319
      %v445 = vpop.f32.mrb[0].mxu0
      %v446 = vadd.f32 %v306, %v445
      %v447 = vpop.f32.mrb[0].mxu0
      %448 = vmatprep.mubr.f32.mxu0 0.0
      %449 = vmatmul.mubr.f32.gmra.mrb[0].mxu0 %v322
      %v450 = vpop.f32.mrb[0].mxu0
      %v451 = vadd.f32 %v306, %v450
      %v452 = vpop.f32.mrb[0].mxu0
      %453 = vmatprep.mubr.f32.mxu0 0.0
      %454 = vmatmul.mubr.f32.gmra.mrb[0].mxu0 %v325
      %v455 = vpop.f32.mrb[0].mxu0
      %v456 = vadd.f32 %v306, %v455
      %v457 = vpop.f32.mrb[0].mxu0
      %458 = vmatprep.mubr.f32.mxu0 0.0
      %459 = vmatmul.mubr.f32.gmra.mrb[0].mxu0 %v328
      %v460 = vpop.f32.mrb[0].mxu0
      %v461 = vadd.f32 %v306, %v460
      %v462 = vpop.f32.mrb[0].mxu0
      %463 = vmatprep.mubr.f32.mxu0 0.0
      %464 = vmatmul.mubr.f32.gmra.mrb[0].mxu0 %v331
      %v465 = vpop.f32.mrb[0].mxu0
      %v466 = vadd.f32 %v306, %v465
      %v467 = vpop.f32.mrb[0].mxu0
      %468 = vmatprep.mubr.f32.mxu0 0.0
      %469 = vmatmul.mubr.f32.gmra.mrb[0].mxu0 %v334
      %v470 = vpop.f32.mrb[0].mxu0
      %v471 = vadd.f32 %v306, %v470
      %v472 = vpop.f32.mrb[0].mxu0
      %473 = vmatprep.mubr.f32.mxu0 0.0
      %474 = vmatmul.mubr.f32.gmra.mrb[0].mxu0 %v337
      %v475 = vpop.f32.mrb[0].mxu0
      %v476 = vadd.f32 %v306, %v475
      %v477 = vpop.f32.mrb[0].mxu0
      %478 = vmatprep.mubr.f32.mxu0 0.0
      %479 = vmatmul.mubr.f32.gmra.mrb[0].mxu0 %v340
      %v480 = vpop.f32.mrb[0].mxu0
      %v481 = vadd.f32 %v306, %v480
      %v482 = vpop.f32.mrb[0].mxu0
      %483 = vmatprep.mubr.f32.mxu0 0.0
      %484 = vmatmul.mubr.f32.gmra.mrb[0].mxu0 %v343
      %v485 = vpop.f32.mrb[0].mxu0
      %v486 = vadd.f32 %v306, %v485
      %v487 = vpop.f32.mrb[0].mxu0
      %488 = vmatprep.mubr.f32.mxu0 0.0
      %489 = vmatmul.mubr.f32.gmra.mrb[0].mxu0 %v346
      %v490 = vpop.f32.mrb[0].mxu0
      %v491 = vadd.f32 %v306, %v490
      %v492 = vpop.f32.mrb[0].mxu0
      %493 = vmatprep.mubr.f32.mxu0 0.0
      %494 = vmatmul.mubr.f32.gmra.mrb[0].mxu0 %v349
      %v495 = vpop.f32.mrb[0].mxu0
      %v496 = vadd.f32 %v306, %v495
      %v497 = vpop.f32.mrb[0].mxu0
      %498 = vmatprep.mubr.f32.mxu0 0.0
      %499 = vmatmul.mubr.f32.gmra.mrb[0].mxu0 %v352
      %v500 = vpop.f32.mrb[0].mxu0
      %v501 = vadd.f32 %v306, %v500
      %v502 = vpop.f32.mrb[0].mxu0
      %503 = vmatprep.mubr.f32.mxu0 0.0
      %504 = vmatmul.mubr.f32.gmra.mrb[0].mxu0 %v355
      %v505 = vpop.f32.mrb[0].mxu0
      %v506 = vadd.f32 %v306, %v505
      %v507 = vpop.f32.mrb[0].mxu0
      %508 = vmatprep.mubr.f32.mxu0 0.0
      %509 = vmatmul.mubr.f32.gmra.mrb[0].mxu0 %v358
      %v510 = vpop.f32.mrb[0].mxu0
      %v511 = vadd.f32 %v306, %v510
      %v512 = vpop.f32.mrb[0].mxu0
      %513 = vdwg.mxu0
      %v514 = vmax.f32 %v431, 0.0
      %v515 = vmax.f32 %v436, 0.0
      %v516 = vmax.f32 %v441, 0.0
      %v517 = vmax.f32 %v446, 0.0
      %v518 = vmax.f32 %v451, 0.0
      %v519 = vmax.f32 %v456, 0.0
      %v520 = vmax.f32 %v461, 0.0
      %v521 = vmax.f32 %v466, 0.0
      %v522 = vmax.f32 %v471, 0.0
      %v523 = vmax.f32 %v476, 0.0
      %v524 = vmax.f32 %v481, 0.0
      %v525 = vmax.f32 %v486, 0.0
      %v526 = vmax.f32 %v491, 0.0
      %v527 = vmax.f32 %v496, 0.0
      %v528 = vmax.f32 %v501, 0.0
      %v529 = vmax.f32 %v506, 0.0
      %v530 = vmax.f32 %v511, 0.0
      %v531 = vld [vmem:[%s3] sm:$0xff]
      %v532 = vld [vmem:[%s3 + $0x8] sm:$0xff]
      %v533 = vld [vmem:[%s3 + $0x10] sm:$0xff]
      %v534 = vld [vmem:[%s3 + $0x18] sm:$0xff]
      %v535 = vld [vmem:[%s3 + $0x20] sm:$0xff]
      %v536 = vld [vmem:[%s3 + $0x28] sm:$0xff]
      %v537 = vld [vmem:[%s3 + $0x30] sm:$0xff]
      %v538 = vld [vmem:[%s3 + $0x38] sm:$0xff]
      %v539 = vld [vmem:[%s4] sm:$0x1]
      %v541 = vlaneseq
      %v542 = vshrl.u32 %v541, 7
      %v543 = vsub.s32 0, %v542
      %v544 = vrot.slane %v539, %v543
      %vm546 = vcmask 523264
      %v548 = vsel %vm546, %v514, 0
      %v551 = vsel %vm546, %v515, 0
      %v554 = vsel %vm546, %v516, 0
      %v557 = vsel %vm546, %v517, 0
      %v560 = vsel %vm546, %v518, 0
      %v563 = vsel %vm546, %v519, 0
      %v566 = vsel %vm546, %v520, 0
      %v569 = vsel %vm546, %v521, 0
      %v572 = vsel %vm546, %v522, 0
      %v575 = vsel %vm546, %v523, 0
      %v578 = vsel %vm546, %v524, 0
      %v581 = vsel %vm546, %v525, 0
      %v584 = vsel %vm546, %v526, 0
      %v587 = vsel %vm546, %v527, 0
      %v590 = vsel %vm546, %v528, 0
      %v593 = vsel %vm546, %v529, 0
      %v596 = vsel %vm546, %v530, 0
      %598 = vmatprep.subr.mxu0 0.0
      %599 = vmatpush1.msra.mxu0 %v531
      %600 = vmatprep.subr.mxu0 0.0
      %601 = vmatpush1.msra.mxu0 %v532
      %602 = vmatprep.subr.mxu0 0.0
      %603 = vmatpush1.msra.mxu0 %v533
      %604 = vmatprep.subr.mxu0 0.0
      %605 = vmatpush1.msra.mxu0 %v534
      %606 = vmatprep.subr.mxu0 0.0
      %607 = vmatpush1.msra.mxu0 %v535
      %608 = vmatprep.subr.mxu0 0.0
      %609 = vmatpush1.msra.mxu0 %v536
      %610 = vmatprep.subr.mxu0 0.0
      %611 = vmatpush1.msra.mxu0 %v537
      %612 = vmatprep.subr.mxu0 0.0
      %613 = vmatpush1.msra.mxu0 %v538
      %614 = vmatprep.subr.mxu0 0.0
      %615 = vmatpush1.msra.mxu0 0.0
      %616 = vmatprep.subr.mxu0 0.0
      %617 = vmatpush1.msra.mxu0 0.0
      %618 = vmatprep.subr.mxu0 0.0
      %619 = vmatpush1.msra.mxu0 0.0
      %620 = vmatprep.subr.mxu0 0.0
      %621 = vmatpush1.msra.mxu0 0.0
      %622 = vmatprep.subr.mxu0 0.0
      %623 = vmatpush1.msra.mxu0 0.0
      %624 = vmatprep.subr.mxu0 0.0
      %625 = vmatpush1.msra.mxu0 0.0
      %626 = vmatprep.subr.mxu0 0.0
      %627 = vmatpush1.msra.mxu0 0.0
      %628 = vmatprep.subr.mxu0 0.0
      %629 = vmatpush1.msra.mxu0 0.0
      %630 = vmatprep.subr.mxu0 0.0
      %631 = vmatpush1.msra.mxu0 0.0
      %632 = vmatprep.subr.mxu0 0.0
      %633 = vmatpush1.msra.mxu0 0.0
      %634 = vmatprep.subr.mxu0 0.0
      %635 = vmatpush1.msra.mxu0 0.0
      %636 = vmatprep.subr.mxu0 0.0
      %637 = vmatpush1.msra.mxu0 0.0
      %638 = vmatprep.subr.mxu0 0.0
      %639 = vmatpush1.msra.mxu0 0.0
      %640 = vmatprep.subr.mxu0 0.0
      %641 = vmatpush1.msra.mxu0 0.0
      %642 = vmatprep.subr.mxu0 0.0
      %643 = vmatpush1.msra.mxu0 0.0
      %644 = vmatprep.subr.mxu0 0.0
      %645 = vmatpush1.msra.mxu0 0.0
      %646 = vmatprep.subr.mxu0 0.0
      %647 = vmatpush1.msra.mxu0 0.0
      %648 = vmatprep.subr.mxu0 0.0
      %649 = vmatpush1.msra.mxu0 0.0
      %650 = vmatprep.subr.mxu0 0.0
      %651 = vmatpush1.msra.mxu0 0.0
      %652 = vmatprep.subr.mxu0 0.0
      %653 = vmatpush1.msra.mxu0 0.0
      %654 = vmatprep.subr.mxu0 0.0
      %655 = vmatpush1.msra.mxu0 0.0
      %656 = vmatprep.subr.mxu0 0.0
      %657 = vmatpush1.msra.mxu0 0.0
      %658 = vmatprep.subr.mxu0 0.0
      %659 = vmatpush1.msra.mxu0 0.0
      %660 = vmatprep.subr.mxu0 0.0
      %661 = vmatpush1.msra.mxu0 0.0
      %662 = vmatprep.mubr.f32.mxu0 0.0
      %663 = vmatmul.mubr.f32.gmra.mrb[0].mxu0 %v548
      %v664 = vpop.f32.mrb[0].mxu0
      %v665 = vadd.f32 %v544, %v664
      %v666 = vpop.f32.mrb[0].mxu0
      %667 = vmatprep.mubr.f32.mxu0 0.0
      %668 = vmatmul.mubr.f32.gmra.mrb[0].mxu0 %v551
      %v669 = vpop.f32.mrb[0].mxu0
      %v670 = vadd.f32 %v544, %v669
      %v671 = vpop.f32.mrb[0].mxu0
      %672 = vmatprep.mubr.f32.mxu0 0.0
      %673 = vmatmul.mubr.f32.gmra.mrb[0].mxu0 %v554
      %v674 = vpop.f32.mrb[0].mxu0
      %v675 = vadd.f32 %v544, %v674
      %v676 = vpop.f32.mrb[0].mxu0
      %677 = vmatprep.mubr.f32.mxu0 0.0
      %678 = vmatmul.mubr.f32.gmra.mrb[0].mxu0 %v557
      %v679 = vpop.f32.mrb[0].mxu0
      %v680 = vadd.f32 %v544, %v679
      %v681 = vpop.f32.mrb[0].mxu0
      %682 = vmatprep.mubr.f32.mxu0 0.0
      %683 = vmatmul.mubr.f32.gmra.mrb[0].mxu0 %v560
      %v684 = vpop.f32.mrb[0].mxu0
      %v685 = vadd.f32 %v544, %v684
      %v686 = vpop.f32.mrb[0].mxu0
      %687 = vmatprep.mubr.f32.mxu0 0.0
      %688 = vmatmul.mubr.f32.gmra.mrb[0].mxu0 %v563
      %v689 = vpop.f32.mrb[0].mxu0
      %v690 = vadd.f32 %v544, %v689
      %v691 = vpop.f32.mrb[0].mxu0
      %692 = vmatprep.mubr.f32.mxu0 0.0
      %693 = vmatmul.mubr.f32.gmra.mrb[0].mxu0 %v566
      %v694 = vpop.f32.mrb[0].mxu0
      %v695 = vadd.f32 %v544, %v694
      %v696 = vpop.f32.mrb[0].mxu0
      %697 = vmatprep.mubr.f32.mxu0 0.0
      %698 = vmatmul.mubr.f32.gmra.mrb[0].mxu0 %v569
      %v699 = vpop.f32.mrb[0].mxu0
      %v700 = vadd.f32 %v544, %v699
      %v701 = vpop.f32.mrb[0].mxu0
      %702 = vmatprep.mubr.f32.mxu0 0.0
      %703 = vmatmul.mubr.f32.gmra.mrb[0].mxu0 %v572
      %v704 = vpop.f32.mrb[0].mxu0
      %v705 = vadd.f32 %v544, %v704
      %v706 = vpop.f32.mrb[0].mxu0
      %707 = vmatprep.mubr.f32.mxu0 0.0
      %708 = vmatmul.mubr.f32.gmra.mrb[0].mxu0 %v575
      %v709 = vpop.f32.mrb[0].mxu0
      %v710 = vadd.f32 %v544, %v709
      %v711 = vpop.f32.mrb[0].mxu0
      %712 = vmatprep.mubr.f32.mxu0 0.0
      %713 = vmatmul.mubr.f32.gmra.mrb[0].mxu0 %v578
      %v714 = vpop.f32.mrb[0].mxu0
      %v715 = vadd.f32 %v544, %v714
      %v716 = vpop.f32.mrb[0].mxu0
      %717 = vmatprep.mubr.f32.mxu0 0.0
      %718 = vmatmul.mubr.f32.gmra.mrb[0].mxu0 %v581
      %v719 = vpop.f32.mrb[0].mxu0
      %v720 = vadd.f32 %v544, %v719
      %v721 = vpop.f32.mrb[0].mxu0
      %722 = vmatprep.mubr.f32.mxu0 0.0
      %723 = vmatmul.mubr.f32.gmra.mrb[0].mxu0 %v584
      %v724 = vpop.f32.mrb[0].mxu0
      %v725 = vadd.f32 %v544, %v724
      %v726 = vpop.f32.mrb[0].mxu0
      %727 = vmatprep.mubr.f32.mxu0 0.0
      %728 = vmatmul.mubr.f32.gmra.mrb[0].mxu0 %v587
      %v729 = vpop.f32.mrb[0].mxu0
      %v730 = vadd.f32 %v544, %v729
      %v731 = vpop.f32.mrb[0].mxu0
      %732 = vmatprep.mubr.f32.mxu0 0.0
      %733 = vmatmul.mubr.f32.gmra.mrb[0].mxu0 %v590
      %v734 = vpop.f32.mrb[0].mxu0
      %v735 = vadd.f32 %v544, %v734
      %v736 = vpop.f32.mrb[0].mxu0
      %737 = vmatprep.mubr.f32.mxu0 0.0
      %738 = vmatmul.mubr.f32.gmra.mrb[0].mxu0 %v593
      %v739 = vpop.f32.mrb[0].mxu0
      %v740 = vadd.f32 %v544, %v739
      %v741 = vpop.f32.mrb[0].mxu0
      %742 = vmatprep.mubr.f32.mxu0 0.0
      %743 = vmatmul.mubr.f32.gmra.mrb[0].mxu0 %v596
      %v744 = vpop.f32.mrb[0].mxu0
      %v745 = vadd.f32 %v544, %v744
      %v746 = vpop.f32.mrb[0].mxu0
      %747 = vdwg.mxu0
      %v748 = vmax.f32 %v665, 0.0
      %v749 = vmax.f32 %v670, 0.0
      %v750 = vmax.f32 %v675, 0.0
      %v751 = vmax.f32 %v680, 0.0
      %v752 = vmax.f32 %v685, 0.0
      %v753 = vmax.f32 %v690, 0.0
      %v754 = vmax.f32 %v695, 0.0
      %v755 = vmax.f32 %v700, 0.0
      %v756 = vmax.f32 %v705, 0.0
      %v757 = vmax.f32 %v710, 0.0
      %v758 = vmax.f32 %v715, 0.0
      %v759 = vmax.f32 %v720, 0.0
      %v760 = vmax.f32 %v725, 0.0
      %v761 = vmax.f32 %v730, 0.0
      %v762 = vmax.f32 %v735, 0.0
      %v763 = vmax.f32 %v740, 0.0
      %v764 = vmax.f32 %v745, 0.0
      %v765 = vld [vmem:[%s5] sm:$0xff]
      %v766 = vld [vmem:[%s5 + $0x8] sm:$0xff]
      %v767 = vld [vmem:[%s5 + $0x10] sm:$0xff]
      %v768 = vld [vmem:[%s5 + $0x18] sm:$0xff]
      %v769 = vld [vmem:[%s5 + $0x20] sm:$0xff]
      %v770 = vld [vmem:[%s5 + $0x28] sm:$0xff]
      %v771 = vld [vmem:[%s5 + $0x30] sm:$0xff]
      %v772 = vld [vmem:[%s5 + $0x38] sm:$0xff]
      %v773 = vld [vmem:[%s6] sm:$0x1]
      %v775 = vlaneseq
      %v776 = vshrl.u32 %v775, 7
      %v777 = vsub.s32 0, %v776
      %v778 = vrot.slane %v773, %v777
      %v781 = vsel %vm546, %v748, 0
      %v784 = vsel %vm546, %v749, 0
      %v787 = vsel %vm546, %v750, 0
      %v790 = vsel %vm546, %v751, 0
      %v793 = vsel %vm546, %v752, 0
      %v796 = vsel %vm546, %v753, 0
      %v799 = vsel %vm546, %v754, 0
      %v802 = vsel %vm546, %v755, 0
      %v805 = vsel %vm546, %v756, 0
      %v808 = vsel %vm546, %v757, 0
      %v811 = vsel %vm546, %v758, 0
      %v814 = vsel %vm546, %v759, 0
      %v817 = vsel %vm546, %v760, 0
      %v820 = vsel %vm546, %v761, 0
      %v823 = vsel %vm546, %v762, 0
      %v826 = vsel %vm546, %v763, 0
      %v829 = vsel %vm546, %v764, 0
      %831 = vmatprep.subr.mxu0 0.0
      %832 = vmatpush1.msra.mxu0 %v765
      %833 = vmatprep.subr.mxu0 0.0
      %834 = vmatpush1.msra.mxu0 %v766
      %835 = vmatprep.subr.mxu0 0.0
      %836 = vmatpush1.msra.mxu0 %v767
      %837 = vmatprep.subr.mxu0 0.0
      %838 = vmatpush1.msra.mxu0 %v768
      %839 = vmatprep.subr.mxu0 0.0
      %840 = vmatpush1.msra.mxu0 %v769
      %841 = vmatprep.subr.mxu0 0.0
      %842 = vmatpush1.msra.mxu0 %v770
      %843 = vmatprep.subr.mxu0 0.0
      %844 = vmatpush1.msra.mxu0 %v771
      %845 = vmatprep.subr.mxu0 0.0
      %846 = vmatpush1.msra.mxu0 %v772
      %847 = vmatprep.subr.mxu0 0.0
      %848 = vmatpush1.msra.mxu0 0.0
      %849 = vmatprep.subr.mxu0 0.0
      %850 = vmatpush1.msra.mxu0 0.0
      %851 = vmatprep.subr.mxu0 0.0
      %852 = vmatpush1.msra.mxu0 0.0
      %853 = vmatprep.subr.mxu0 0.0
      %854 = vmatpush1.msra.mxu0 0.0
      %855 = vmatprep.subr.mxu0 0.0
      %856 = vmatpush1.msra.mxu0 0.0
      %857 = vmatprep.subr.mxu0 0.0
      %858 = vmatpush1.msra.mxu0 0.0
      %859 = vmatprep.subr.mxu0 0.0
      %860 = vmatpush1.msra.mxu0 0.0
      %861 = vmatprep.subr.mxu0 0.0
      %862 = vmatpush1.msra.mxu0 0.0
      %863 = vmatprep.subr.mxu0 0.0
      %864 = vmatpush1.msra.mxu0 0.0
      %865 = vmatprep.subr.mxu0 0.0
      %866 = vmatpush1.msra.mxu0 0.0
      %867 = vmatprep.subr.mxu0 0.0
      %868 = vmatpush1.msra.mxu0 0.0
      %869 = vmatprep.subr.mxu0 0.0
      %870 = vmatpush1.msra.mxu0 0.0
      %871 = vmatprep.subr.mxu0 0.0
      %872 = vmatpush1.msra.mxu0 0.0
      %873 = vmatprep.subr.mxu0 0.0
      %874 = vmatpush1.msra.mxu0 0.0
      %875 = vmatprep.subr.mxu0 0.0
      %876 = vmatpush1.msra.mxu0 0.0
      %877 = vmatprep.subr.mxu0 0.0
      %878 = vmatpush1.msra.mxu0 0.0
      %879 = vmatprep.subr.mxu0 0.0
      %880 = vmatpush1.msra.mxu0 0.0
      %881 = vmatprep.subr.mxu0 0.0
      %882 = vmatpush1.msra.mxu0 0.0
      %883 = vmatprep.subr.mxu0 0.0
      %884 = vmatpush1.msra.mxu0 0.0
      %885 = vmatprep.subr.mxu0 0.0
      %886 = vmatpush1.msra.mxu0 0.0
      %887 = vmatprep.subr.mxu0 0.0
      %888 = vmatpush1.msra.mxu0 0.0
      %889 = vmatprep.subr.mxu0 0.0
      %890 = vmatpush1.msra.mxu0 0.0
      %891 = vmatprep.subr.mxu0 0.0
      %892 = vmatpush1.msra.mxu0 0.0
      %893 = vmatprep.subr.mxu0 0.0
      %894 = vmatpush1.msra.mxu0 0.0
      %895 = vmatprep.mubr.f32.mxu0 0.0
      %896 = vmatmul.mubr.f32.gmra.mrb[0].mxu0 %v781
      %v897 = vpop.f32.mrb[0].mxu0
      %v898 = vadd.f32 %v778, %v897
      %v899 = vpop.f32.mrb[0].mxu0
      %900 = vmatprep.mubr.f32.mxu0 0.0
      %901 = vmatmul.mubr.f32.gmra.mrb[0].mxu0 %v784
      %v902 = vpop.f32.mrb[0].mxu0
      %v903 = vadd.f32 %v778, %v902
      %v904 = vpop.f32.mrb[0].mxu0
      %905 = vmatprep.mubr.f32.mxu0 0.0
      %906 = vmatmul.mubr.f32.gmra.mrb[0].mxu0 %v787
      %v907 = vpop.f32.mrb[0].mxu0
      %v908 = vadd.f32 %v778, %v907
      %v909 = vpop.f32.mrb[0].mxu0
      %910 = vmatprep.mubr.f32.mxu0 0.0
      %911 = vmatmul.mubr.f32.gmra.mrb[0].mxu0 %v790
      %v912 = vpop.f32.mrb[0].mxu0
      %v913 = vadd.f32 %v778, %v912
      %v914 = vpop.f32.mrb[0].mxu0
      %915 = vmatprep.mubr.f32.mxu0 0.0
      %916 = vmatmul.mubr.f32.gmra.mrb[0].mxu0 %v793
      %v917 = vpop.f32.mrb[0].mxu0
      %v918 = vadd.f32 %v778, %v917
      %v919 = vpop.f32.mrb[0].mxu0
      %920 = vmatprep.mubr.f32.mxu0 0.0
      %921 = vmatmul.mubr.f32.gmra.mrb[0].mxu0 %v796
      %v922 = vpop.f32.mrb[0].mxu0
      %v923 = vadd.f32 %v778, %v922
      %v924 = vpop.f32.mrb[0].mxu0
      %925 = vmatprep.mubr.f32.mxu0 0.0
      %926 = vmatmul.mubr.f32.gmra.mrb[0].mxu0 %v799
      %v927 = vpop.f32.mrb[0].mxu0
      %v928 = vadd.f32 %v778, %v927
      %v929 = vpop.f32.mrb[0].mxu0
      %930 = vmatprep.mubr.f32.mxu0 0.0
      %931 = vmatmul.mubr.f32.gmra.mrb[0].mxu0 %v802
      %v932 = vpop.f32.mrb[0].mxu0
      %v933 = vadd.f32 %v778, %v932
      %v934 = vpop.f32.mrb[0].mxu0
      %935 = vmatprep.mubr.f32.mxu0 0.0
      %936 = vmatmul.mubr.f32.gmra.mrb[0].mxu0 %v805
      %v937 = vpop.f32.mrb[0].mxu0
      %v938 = vadd.f32 %v778, %v937
      %v939 = vpop.f32.mrb[0].mxu0
      %940 = vmatprep.mubr.f32.mxu0 0.0
      %941 = vmatmul.mubr.f32.gmra.mrb[0].mxu0 %v808
      %v942 = vpop.f32.mrb[0].mxu0
      %v943 = vadd.f32 %v778, %v942
      %v944 = vpop.f32.mrb[0].mxu0
      %945 = vmatprep.mubr.f32.mxu0 0.0
      %946 = vmatmul.mubr.f32.gmra.mrb[0].mxu0 %v811
      %v947 = vpop.f32.mrb[0].mxu0
      %v948 = vadd.f32 %v778, %v947
      %v949 = vpop.f32.mrb[0].mxu0
      %950 = vmatprep.mubr.f32.mxu0 0.0
      %951 = vmatmul.mubr.f32.gmra.mrb[0].mxu0 %v814
      %v952 = vpop.f32.mrb[0].mxu0
      %v953 = vadd.f32 %v778, %v952
      %v954 = vpop.f32.mrb[0].mxu0
      %955 = vmatprep.mubr.f32.mxu0 0.0
      %956 = vmatmul.mubr.f32.gmra.mrb[0].mxu0 %v817
      %v957 = vpop.f32.mrb[0].mxu0
      %v958 = vadd.f32 %v778, %v957
      %v959 = vpop.f32.mrb[0].mxu0
      %960 = vmatprep.mubr.f32.mxu0 0.0
      %961 = vmatmul.mubr.f32.gmra.mrb[0].mxu0 %v820
      %v962 = vpop.f32.mrb[0].mxu0
      %v963 = vadd.f32 %v778, %v962
      %v964 = vpop.f32.mrb[0].mxu0
      %965 = vmatprep.mubr.f32.mxu0 0.0
      %966 = vmatmul.mubr.f32.gmra.mrb[0].mxu0 %v823
      %v967 = vpop.f32.mrb[0].mxu0
      %v968 = vadd.f32 %v778, %v967
      %v969 = vpop.f32.mrb[0].mxu0
      %970 = vmatprep.mubr.f32.mxu0 0.0
      %971 = vmatmul.mubr.f32.gmra.mrb[0].mxu0 %v826
      %v972 = vpop.f32.mrb[0].mxu0
      %v973 = vadd.f32 %v778, %v972
      %v974 = vpop.f32.mrb[0].mxu0
      %975 = vmatprep.mubr.f32.mxu0 0.0
      %976 = vmatmul.mubr.f32.gmra.mrb[0].mxu0 %v829
      %v977 = vpop.f32.mrb[0].mxu0
      %v978 = vadd.f32 %v778, %v977
      %v979 = vpop.f32.mrb[0].mxu0
      %980 = vdwg.mxu0
      %vm981 = vcmask 15360
      %982 = vst.msk [vmem:[%s280] sm:$0xff] %vm981, %v898
      %983 = vst.msk [vmem:[%s280 + $0x8] sm:$0xff] %vm981, %v903
      %984 = vst.msk [vmem:[%s280 + $0x10] sm:$0xff] %vm981, %v908
      %985 = vst.msk [vmem:[%s280 + $0x18] sm:$0xff] %vm981, %v913
      %986 = vst.msk [vmem:[%s280 + $0x20] sm:$0xff] %vm981, %v918
      %987 = vst.msk [vmem:[%s280 + $0x28] sm:$0xff] %vm981, %v923
      %988 = vst.msk [vmem:[%s280 + $0x30] sm:$0xff] %vm981, %v928
      %989 = vst.msk [vmem:[%s280 + $0x38] sm:$0xff] %vm981, %v933
      %990 = vst.msk [vmem:[%s280 + $0x40] sm:$0xff] %vm981, %v938
      %991 = vst.msk [vmem:[%s280 + $0x48] sm:$0xff] %vm981, %v943
      %992 = vst.msk [vmem:[%s280 + $0x50] sm:$0xff] %vm981, %v948
      %993 = vst.msk [vmem:[%s280 + $0x58] sm:$0xff] %vm981, %v953
      %994 = vst.msk [vmem:[%s280 + $0x60] sm:$0xff] %vm981, %v958
      %995 = vst.msk [vmem:[%s280 + $0x68] sm:$0xff] %vm981, %v963
      %996 = vst.msk [vmem:[%s280 + $0x70] sm:$0xff] %vm981, %v968
      %997 = vst.msk [vmem:[%s280 + $0x78] sm:$0xff] %vm981, %v973
      %998 = vst.msk [vmem:[%s280 + $0x80] sm:$0xff] %vm981, %v978
      %s999 = smul.u32 17, %s18
      %p1000 = scmp.lt.s32.totalorder %s999, 33
      %s1001 = scalar_select %p1000, %s999, 33
      %s1002 = smul.addr %s1001, 8
      %s1003 = scalar_lea.vmem %s7, %s1002
      // Predicated region
      $region49: #{tpu_custom_call.1} parent=47 // pred_check
        %p1004 = pneg %p188
      $region50: #{tpu_custom_call.1} parent=47 // pred_check_branch
        %1006 = sbr.rel (%p1004) target = $region52
      $region51: #{tpu_custom_call.1} parent=47 // pred_region
        %s1007 = smul.u32 17, %s18
      $region52: #{tpu_custom_call.1} parent=47 // pred_fallthru
        _
    $region48: #{tpu_custom_call.1} parent=5 // pred_fallthru
      _
    %p1008 = scmp.le.s32.totalorder 2, %s13
    // Predicated region
    $region53: #{tpu_custom_call.1} parent=5 // pred_check
      %p1009 = pneg %p1008
    $region54: #{tpu_custom_call.1} parent=5 // pred_check_branch
      %1011 = sbr.rel (%p1009) target = $region56
    $region55: #{tpu_custom_call.1} parent=5 // pred_region
      %s1012 = ssub.s32 %s13, 2
      // Predicated region
      $region57: #{tpu_custom_call.1} parent=55 // pred_check
        %p1013 = pneg %p194
      $region58: #{tpu_custom_call.1} parent=55 // pred_check_branch
        %1015 = sbr.rel (%p1013) target = $region60
      $region59: #{tpu_custom_call.1} parent=55 // pred_region
        %s1016 = smul.u32 17, %s19
        %p1017 = scmp.lt.s32.totalorder %s1016, 33
        %s1018 = scalar_select %p1017, %s1016, 33
        %s1019 = smul.addr %s1018, 8
        %s1020 = scalar_lea.vmem %s7, %s1019
      $region60: #{tpu_custom_call.1} parent=55 // pred_fallthru
        _
    $region56: #{tpu_custom_call.1} parent=5 // pred_fallthru
      _
  $region6: #{tpu_custom_call.1} parent=0 // loop_footer
    %s17 = sadd.s32 1, %s13
  $region7: #{tpu_custom_call.1} parent=0 // loop_footer_branch
    %12 = sbr.rel target = $region3
  $region8: #{tpu_custom_call.1} parent=0 // loop_exit
    _

</llo_original>
